<compile_context>
chip_gen: v5e
topology: v5e:2x2
jax: 0.10.0
libtpu: 0.0.40
codegen_flags: <defaults>
</compile_context>

<pallas_src>
import functools
from math import sqrt

import jax
import jax.numpy as jnp
from jax.experimental import pallas as pl
from jax.experimental.pallas import tpu as pltpu


def _round_up(x, m):
    return (x + m - 1) // m * m


def _linear_kernel(x_ref, w_ref, b_ref, o_ref, acc_ref, *, apply_relu):
    # x_ref: (tm, tk)   activation tile
    # w_ref: (tn, tk)   weight tile in PyTorch (dim_out, dim_in) layout
    # b_ref: (1, tn)    bias tile
    # o_ref: (tm, tn)   output tile (resident across the K axis)
    # acc_ref: (tm, tn) f32 accumulator scratch
    k = pl.program_id(2)

    @pl.when(k == 0)
    def _():
        acc_ref[...] = jnp.zeros_like(acc_ref)

    # Contract on the last axis of both operands (== x @ W.T) on the MXU.
    acc_ref[...] += jax.lax.dot_general(
        x_ref[...], w_ref[...],
        dimension_numbers=(((1,), (1,)), ((), ())),
        preferred_element_type=jnp.float32)

    @pl.when(k == pl.num_programs(2) - 1)
    def _():
        acc = acc_ref[...] + b_ref[...].astype(jnp.float32)
        if apply_relu:
            acc = jnp.maximum(acc, 0.0)
        o_ref[...] = acc.astype(o_ref.dtype)


def linear_pallas(x2d, weight, bias, *, apply_relu=False, tm=256, tn=256, tk=512):
    """y = x2d @ weight.T + bias (optionally ReLU), matching nn.Linear semantics."""
    m, kdim = x2d.shape
    n = weight.shape[0]

    # Lane-aligned tile sizes, clamped for small problems.
    tm = min(tm, _round_up(m, 8))
    tn = min(tn, _round_up(n, 128))
    tk = min(tk, _round_up(kdim, 128))
    mp, np_, kp = _round_up(m, tm), _round_up(n, tn), _round_up(kdim, tk)

    x_p = x2d if (mp == m and kp == kdim) else jnp.pad(x2d, ((0, mp - m), (0, kp - kdim)))
    w_p = weight if (np_ == n and kp == kdim) else jnp.pad(weight, ((0, np_ - n), (0, kp - kdim)))
    b_p = (bias if np_ == n else jnp.pad(bias, (0, np_ - n))).reshape(1, np_)

    grid = (mp // tm, np_ // tn, kp // tk)
    itemsize = jnp.dtype(x2d.dtype).itemsize

    out = pl.pallas_call(
        functools.partial(_linear_kernel, apply_relu=apply_relu),
        out_shape=jax.ShapeDtypeStruct((mp, np_), x2d.dtype),
        grid_spec=pltpu.PrefetchScalarGridSpec(
            num_scalar_prefetch=0,
            grid=grid,
            in_specs=[
                pl.BlockSpec((tm, tk), lambda i, j, k: (i, k)),   # x
                pl.BlockSpec((tn, tk), lambda i, j, k: (j, k)),   # W (PyTorch layout)
                pl.BlockSpec((1, tn), lambda i, j, k: (0, j)),    # bias
            ],
            out_specs=pl.BlockSpec((tm, tn), lambda i, j, k: (i, j)),
            scratch_shapes=[pltpu.VMEM((tm, tn), jnp.float32)],
        ),
        compiler_params=pltpu.CompilerParams(
            dimension_semantics=("parallel", "parallel", "arbitrary")),
        cost_estimate=pl.CostEstimate(
            flops=2 * mp * np_ * kp,
            transcendentals=0,
            bytes_accessed=(mp * kp + np_ * kp + mp * np_) * itemsize),
    )(x_p, w_p, b_p)

    if mp == m and np_ == n:
        return out
    return out[:m, :n]


def init_mlp_params(key, dims, dtype=jnp.float32):
    """nn.Linear default init: U[-1/sqrt(fan_in), 1/sqrt(fan_in)] for W and b."""
    params = []
    for i in range(len(dims) - 1):
        key, kw, kb = jax.random.split(key, 3)
        bound = 1.0 / sqrt(dims[i])
        w = jax.random.uniform(kw, (dims[i + 1], dims[i]), dtype, -bound, bound)
        b = jax.random.uniform(kb, (dims[i + 1],), dtype, -bound, bound)
        params.append((w, b))
    return params


def mlp_forward(x, params):
    """Linear -> ReLU -> ... -> Linear (no ReLU on the last layer)."""
    orig_shape = x.shape
    x2d = x.reshape(-1, orig_shape[-1])
    n_layers = len(params)
    for idx, (w, b) in enumerate(params):
        x2d = linear_pallas(x2d, w, b, apply_relu=(idx < n_layers - 1))
    return x2d.reshape(*orig_shape[:-1], params[-1][0].shape[0])


if __name__ == "__main__":
    dims = [784, 256, 64, 64, 62]
    batch = 8

    key = jax.random.PRNGKey(0)
    k_x, k_p = jax.random.split(key)
    x = jax.random.normal(k_x, (batch, dims[0]), jnp.float32)
    params = init_mlp_params(k_p, dims)

    y = mlp_forward(x, params)
    y = jax.block_until_ready(y)

    # Pure-JAX reference of the same MLP forward.
    ref = x
    for idx, (w, b) in enumerate(params):
        ref = ref @ w.T + b
        if idx < len(params) - 1:
            ref = jnp.maximum(ref, 0.0)

    assert y.shape == (batch, dims[-1])
    assert jnp.allclose(y, ref, atol=2e-2, rtol=2e-2), float(jnp.max(jnp.abs(y - ref)))

    print("KERNEL_OK")
</pallas_src>

<mosaic_0001>
module attributes {stable_mosaic.version = 11 : i64} {
  func.func @_linear_kernel(%arg0: i32, %arg1: i32, %arg2: i32, %arg3: memref<8x512xf32, #tpu.memory_space<vmem>>, %arg4: memref<256x512xf32, #tpu.memory_space<vmem>>, %arg5: memref<1x256xf32, #tpu.memory_space<vmem>>, %arg6: memref<8x256xf32, #tpu.memory_space<vmem>>, %arg7: memref<8x256xf32, #tpu.memory_space<vmem>>) attributes {dimension_semantics = [#tpu.dimension_semantics<parallel>, #tpu.dimension_semantics<parallel>, #tpu.dimension_semantics<arbitrary>], iteration_bounds = array<i64: 1, 1, 2>, scalar_prefetch = 0 : i64, scratch_operands = 1 : i64, tpu.core_type = #tpu.core_type<tc>, window_params = [{transform_indices = @transform_0, window_bounds = array<i64: 8, 512>}, {transform_indices = @transform_1, window_bounds = array<i64: 256, 512>}, {transform_indices = @transform_2, window_bounds = array<i64: 1, 256>}, {transform_indices = @transform_3, window_bounds = array<i64: 8, 256>}]} {
    %c0_i32 = arith.constant 0 : i32
    %0 = arith.cmpi eq, %arg2, %c0_i32 : i32
    %1 = arith.extui %0 : i1 to i32
    %c0_i32_0 = arith.constant 0 : i32
    %2 = arith.cmpi ne, %1, %c0_i32_0 : i32
    scf.if %2 {
      %cst_9 = arith.constant 0.000000e+00 : f32
      %12 = vector.broadcast %cst_9 : f32 to vector<8x256xf32>
      %c0_10 = arith.constant 0 : index
      %c0_11 = arith.constant 0 : index
      %13 = vector.load %arg7[%c0_10, %c0_11] : memref<8x256xf32, #tpu.memory_space<vmem>>, vector<8x256xf32>
      tpu.vector_store %arg7[%c0_10, %c0_11], %12 {strides = array<i32>} : memref<8x256xf32, #tpu.memory_space<vmem>>, vector<8x256xf32>,
    } else {
    }
    %c0 = arith.constant 0 : index
    %c0_1 = arith.constant 0 : index
    %3 = vector.load %arg7[%c0, %c0_1] : memref<8x256xf32, #tpu.memory_space<vmem>>, vector<8x256xf32>
    %c0_2 = arith.constant 0 : index
    %c0_3 = arith.constant 0 : index
    %4 = vector.load %arg3[%c0_2, %c0_3] : memref<8x512xf32, #tpu.memory_space<vmem>>, vector<8x512xf32>
    %c0_4 = arith.constant 0 : index
    %c0_5 = arith.constant 0 : index
    %5 = vector.load %arg4[%c0_4, %c0_5] : memref<256x512xf32, #tpu.memory_space<vmem>>, vector<256x512xf32>
    %cst = arith.constant dense<0.000000e+00> : vector<8x256xf32>
    %6 = tpu.matmul %4, %5, %cst {dimension_numbers = #tpu.dot_dimension_numbers<[1], [1], [0], [0], [0, 0, 1, 0], [], []>} : vector<8x512xf32>, vector<256x512xf32>, vector<8x256xf32> -> vector<8x256xf32>
    %7 = arith.addf %3, %6 : vector<8x256xf32>
    %c0_6 = arith.constant 0 : index
    %c0_7 = arith.constant 0 : index
    %8 = vector.load %arg7[%c0_6, %c0_7] : memref<8x256xf32, #tpu.memory_space<vmem>>, vector<8x256xf32>
    tpu.vector_store %arg7[%c0_6, %c0_7], %7 {strides = array<i32>} : memref<8x256xf32, #tpu.memory_space<vmem>>, vector<8x256xf32>,
    %c1_i32 = arith.constant 1 : i32
    %9 = arith.cmpi eq, %arg2, %c1_i32 : i32
    %10 = arith.extui %9 : i1 to i32
    %c0_i32_8 = arith.constant 0 : i32
    %11 = arith.cmpi ne, %10, %c0_i32_8 : i32
    scf.if %11 {
      %c0_9 = arith.constant 0 : index
      %c0_10 = arith.constant 0 : index
      %12 = vector.load %arg7[%c0_9, %c0_10] : memref<8x256xf32, #tpu.memory_space<vmem>>, vector<8x256xf32>
      %c0_11 = arith.constant 0 : index
      %c0_12 = arith.constant 0 : index
      %13 = vector.load %arg5[%c0_11, %c0_12] : memref<1x256xf32, #tpu.memory_space<vmem>>, vector<1x256xf32>
      %14 = vector.broadcast %13 : vector<1x256xf32> to vector<8x256xf32>
      %15 = arith.addf %12, %14 : vector<8x256xf32>
      %cst_13 = arith.constant 0.000000e+00 : f32
      %16 = vector.broadcast %cst_13 : f32 to vector<8x256xf32>
      %17 = arith.maximumf %15, %16 : vector<8x256xf32>
      %c0_14 = arith.constant 0 : index
      %c0_15 = arith.constant 0 : index
      %18 = vector.load %arg6[%c0_14, %c0_15] : memref<8x256xf32, #tpu.memory_space<vmem>>, vector<8x256xf32>
      tpu.vector_store %arg6[%c0_14, %c0_15], %17 {strides = array<i32>} : memref<8x256xf32, #tpu.memory_space<vmem>>, vector<8x256xf32>,
    } else {
    }
    return
  }
  func.func @transform_0(%arg0: i32, %arg1: i32, %arg2: i32) -> (i32, i32) {
    %c0_i32 = arith.constant 0 : i32
    return %arg0, %arg2 : i32, i32
  }
  func.func @transform_1(%arg0: i32, %arg1: i32, %arg2: i32) -> (i32, i32) {
    %c0_i32 = arith.constant 0 : i32
    return %arg1, %arg2 : i32, i32
  }
  func.func @transform_2(%arg0: i32, %arg1: i32, %arg2: i32) -> (i32, i32) {
    %c0_i32 = arith.constant 0 : i32
    %c0_i32_0 = arith.constant 0 : i32
    return %c0_i32, %arg1 : i32, i32
  }
  func.func @transform_3(%arg0: i32, %arg1: i32, %arg2: i32) -> (i32, i32) {
    %c0_i32 = arith.constant 0 : i32
    return %arg0, %arg1 : i32, i32
  }
}

</mosaic_0001>

<llo_original>
// kernel: tpu_custom_call.1
$region0: #{tpu_custom_call.1}
  #allocation0 [shape = 'u32[]', space=smem, size = 0x4, offset = 0x4, fixed_abs, tag = 'smem constant byte address 0x4 - core index']
  #allocation1 [shape = 'u32[72,128]{1,0:T(1,128)}', space=vmem, size = 0x9000, scoped, tag = 'internal scratch']
  #allocation2 [shape = 'f32[8,256]{1,0:T(8,128)}', space=vmem, size = 0x2000, scoped, tag = 'scratch operand']
  %s0 = inlined_call_operand.hbm [shape: f32[8,1024], index: 0, kind: input, shape index: {}]
  %s1 = inlined_call_operand.hbm [shape: f32[256,1024], index: 1, kind: input, shape index: {}]
  %s2 = inlined_call_operand.hbm [shape: f32[1,256], index: 2, kind: input, shape index: {}]
  %s3 = inlined_call_operand.hbm [shape: f32[8,256], index: 3, kind: output, shape index: {}]
  %s4 = sld [smem:[#allocation0]]
  $region65: #{tpu_custom_call.1} parent=0
    _
  %s6 = ssub.s32 1, %s4
  %s7 = scalar_select 0, %s6, %s4
  $region1: #{tpu_custom_call.1} parent=0
    #allocation3 [shape = 'u8[32768]{0}', space=vmem, size = 0x8000, scoped, tag = 'input window, operand 0']
    #allocation4 [shape = 's32[2]{0}', space=sflag, size = 0x8, scoped, tag = 'scoped memory for tpu_custom_call.1']
    #allocation5 [shape = 's32[2]{0}', space=sflag, size = 0x8, scoped, tag = 'scoped memory for tpu_custom_call.1']
    #allocation6 [shape = 'u8[1048576]{0}', space=vmem, size = 0x100000, scoped, tag = 'input window, operand 1']
    #allocation7 [shape = 's32[2]{0}', space=sflag, size = 0x8, scoped, tag = 'scoped memory for tpu_custom_call.1']
    #allocation8 [shape = 'u8[1024]{0}', space=vmem, size = 0x400, scoped, tag = 'input window, operand 2, single buffered']
    #allocation9 [shape = 'u8[8192]{0}', space=vmem, size = 0x2000, scoped, tag = 'output window, operand 0, single buffered']
    %8 = vsyncpa [#allocation4], 0
    %s9 = scalar_lea.sflag [#allocation4], 1
    %10 = vsyncpa %s9, 0
    %11 = vsyncpa [#allocation7], 0
    %s12 = scalar_lea.sflag [#allocation7], 1
    %13 = vsyncpa %s12, 0
    %14 = vsyncpa [#allocation5], 0
    loop: start=0, step=1, limit=4
    $region2: #{tpu_custom_call.1} parent=1 // loop_pre_header
      _
    $region3: #{tpu_custom_call.1} parent=1 // loop_header
      %s16 = sphi 0, %s20
      %p17 = scmp.ge.s32.totalorder %s16, 4
      %s23 = sphi 0, %s42
      %s24 = sphi 0, %s38
      %s25 = sphi 0, %s34
      %s26 = sphi 0, %s23
      %s27 = sphi 0, %s24
      %s28 = sphi 0, %s25
      %s29 = sphi 0, %s26
      %s30 = sphi 0, %s27
      %s31 = sphi 0, %s28
      %s47 = sphi 0, %s49
      %s50 = sphi 0, %s47
      %s51 = sphi 0, %s50
      %s67 = sphi 0, %s51
      %s75 = sphi 0, %s77
      %s78 = sphi 0, %s75
      %s79 = sphi 0, %s78
      %s95 = sphi 0, %s79
      %s101 = sphi 0, %s103
      %s104 = sphi 0, %s101
      %s105 = sphi 0, %s104
      %s121 = sphi 0, %s105
      %s129 = sphi 0, %s131
      %s132 = sphi 0, %s129
      %s133 = sphi 0, %s132
      %s149 = sphi 0, %s133
    $region4: #{tpu_custom_call.1} parent=1 // loop_header_branch
      %19 = sbr.rel (%p17) target = $region8
    $region5: #{tpu_custom_call.1} parent=1 // loop_body
      %s21 = ssub.s32 %s16, 1
      %s22 = ssub.s32 %s16, 2
      %s32 = sadd.s32 1, %s25
      %p33 = scmp.ge.s32.totalorder %s32, 2
      %s34 = scalar_select %p33, 0, %s32
      %s35 = sadd.s32 1, %s24
      %s36 = scalar_select %p33, %s35, %s24
      %p37 = scmp.ge.s32.totalorder %s36, 1
      %s38 = scalar_select %p37, 0, %s36
      %s39 = sadd.s32 1, %s23
      %s40 = scalar_select %p37, %s39, %s23
      %p41 = scmp.ge.s32.totalorder %s40, 1
      %s42 = scalar_select %p41, 0, %s40
      %s43 = ssub.s32 %s23, %s42
      %s44 = ssub.s32 %s25, %s34
      %s45 = sor.u32 %s43, %s44
      %p46 = scmp.eq.s32.totalorder %s45, 0
      %s48 = sadd.s32 %s47, 1
      %s49 = scalar_select %p46, %s47, %s48
      %p52 = pneg %p46
      %p53 = scmp.eq.s32.totalorder %s16, 1
      %p54 = por %p52, %p53
      %p55 = scmp.ne.s32.totalorder %s47, %s50
      %p56 = scmp.eq.s32.totalorder %s16, 0
      %p57 = por %p55, %p56
      %p58 = scmp.ne.s32.totalorder %s47, %s50
      %p59 = scmp.eq.s32.totalorder %s21, 1
      %p60 = por %p58, %p59
      %p61 = scmp.ne.s32.totalorder %s50, %s51
      %p62 = scmp.eq.s32.totalorder %s21, 0
      %p63 = por %p61, %p62
      %p64 = scmp.ne.s32.totalorder %s50, %s51
      %p65 = scmp.eq.s32.totalorder %s22, 1
      %p66 = por %p64, %p65
      %p68 = scmp.ne.s32.totalorder %s51, %s67
      %p69 = scmp.eq.s32.totalorder %s22, 0
      %p70 = por %p68, %p69
      %s71 = ssub.s32 %s24, %s38
      %s72 = ssub.s32 %s25, %s34
      %s73 = sor.u32 %s71, %s72
      %p74 = scmp.eq.s32.totalorder %s73, 0
      %s76 = sadd.s32 %s75, 1
      %s77 = scalar_select %p74, %s75, %s76
      %p80 = pneg %p74
      %p81 = scmp.eq.s32.totalorder %s16, 1
      %p82 = por %p80, %p81
      %p83 = scmp.ne.s32.totalorder %s75, %s78
      %p84 = scmp.eq.s32.totalorder %s16, 0
      %p85 = por %p83, %p84
      %p86 = scmp.ne.s32.totalorder %s75, %s78
      %p87 = scmp.eq.s32.totalorder %s21, 1
      %p88 = por %p86, %p87
      %p89 = scmp.ne.s32.totalorder %s78, %s79
      %p90 = scmp.eq.s32.totalorder %s21, 0
      %p91 = por %p89, %p90
      %p92 = scmp.ne.s32.totalorder %s78, %s79
      %p93 = scmp.eq.s32.totalorder %s22, 1
      %p94 = por %p92, %p93
      %p96 = scmp.ne.s32.totalorder %s79, %s95
      %p97 = scmp.eq.s32.totalorder %s22, 0
      %p98 = por %p96, %p97
      %s99 = ssub.s32 %s24, %s38
      %p100 = scmp.eq.s32.totalorder %s99, 0
      %s102 = sadd.s32 %s101, 1
      %s103 = scalar_select %p100, %s101, %s102
      %p106 = pneg %p100
      %p107 = scmp.eq.s32.totalorder %s16, 1
      %p108 = por %p106, %p107
      %p109 = scmp.ne.s32.totalorder %s101, %s104
      %p110 = scmp.eq.s32.totalorder %s16, 0
      %p111 = por %p109, %p110
      %p112 = scmp.ne.s32.totalorder %s101, %s104
      %p113 = scmp.eq.s32.totalorder %s21, 1
      %p114 = por %p112, %p113
      %p115 = scmp.ne.s32.totalorder %s104, %s105
      %p116 = scmp.eq.s32.totalorder %s21, 0
      %p117 = por %p115, %p116
      %p118 = scmp.ne.s32.totalorder %s104, %s105
      %p119 = scmp.eq.s32.totalorder %s22, 1
      %p120 = por %p118, %p119
      %p122 = scmp.ne.s32.totalorder %s105, %s121
      %p123 = scmp.eq.s32.totalorder %s22, 0
      %p124 = por %p122, %p123
      %s125 = ssub.s32 %s23, %s42
      %s126 = ssub.s32 %s24, %s38
      %s127 = sor.u32 %s125, %s126
      %p128 = scmp.eq.s32.totalorder %s127, 0
      %s130 = sadd.s32 %s129, 1
      %s131 = scalar_select %p128, %s129, %s130
      %p134 = pneg %p128
      %p135 = scmp.eq.s32.totalorder %s16, 1
      %p136 = por %p134, %p135
      %p137 = scmp.ne.s32.totalorder %s129, %s132
      %p138 = scmp.eq.s32.totalorder %s16, 0
      %p139 = por %p137, %p138
      %p140 = scmp.ne.s32.totalorder %s129, %s132
      %p141 = scmp.eq.s32.totalorder %s21, 1
      %p142 = por %p140, %p141
      %p143 = scmp.ne.s32.totalorder %s132, %s133
      %p144 = scmp.eq.s32.totalorder %s21, 0
      %p145 = por %p143, %p144
      %p146 = scmp.ne.s32.totalorder %s132, %s133
      %p147 = scmp.eq.s32.totalorder %s22, 1
      %p148 = por %p146, %p147
      %p150 = scmp.ne.s32.totalorder %s133, %s149
      %p151 = scmp.eq.s32.totalorder %s22, 0
      %p152 = por %p150, %p151
      %p153 = scmp.le.s32.totalorder 1, %s16
      %p154 = scmp.lt.s32.totalorder %s16, 3
      %p155 = pnand %p153, %p154
      %p156 = pneg %p155
      // Predicated region
      $region9: #{tpu_custom_call.1} parent=5 // pred_check
        _
      $region10: #{tpu_custom_call.1} parent=5 // pred_check_branch
        %158 = sbr.rel (%p155) target = $region12
      $region11: #{tpu_custom_call.1} parent=5 // pred_region
        %s159 = ssub.s32 %s16, 1
        // Predicated region
        $region13: #{tpu_custom_call.1} parent=11 // pred_check
          %p160 = pneg %p117
        $region14: #{tpu_custom_call.1} parent=11 // pred_check_branch
          %162 = sbr.rel (%p160) target = $region16
        $region15: #{tpu_custom_call.1} parent=11 // pred_region
          %s163 = smul.u32 2, %s27
          %165 = vsyncadd [#allocation7], 0
          %s166 = scalar_lea.hbm %s2, %s163
          %s168 = sshll.u32 %s166, 4
          %s169 = int_to_ptr.hbm [resolvable:$true] %s168
          %s170 = sshll.u32 [#allocation8], 4
          %s171 = int_to_ptr.vmem [resolvable:$true] %s170
          %173 = dma.hbm_to_vmem [thread:$0]  %s169, 32, %s171, [#allocation7]
        $region16: #{tpu_custom_call.1} parent=11 // pred_fallthru
          _
      $region12: #{tpu_custom_call.1} parent=5 // pred_fallthru
        _
      %p174 = scmp.lt.s32.totalorder %s16, 2
      // Predicated region
      $region17: #{tpu_custom_call.1} parent=5 // pred_check
        %p175 = pneg %p174
      $region18: #{tpu_custom_call.1} parent=5 // pred_check_branch
        %177 = sbr.rel (%p175) target = $region20
      $region19: #{tpu_custom_call.1} parent=5 // pred_region
        // Predicated region
        $region21: #{tpu_custom_call.1} parent=19 // pred_check
          %p178 = pneg %p57
        $region22: #{tpu_custom_call.1} parent=19 // pred_check_branch
          %180 = sbr.rel (%p178) target = $region24
        $region23: #{tpu_custom_call.1} parent=19 // pred_region
          %s181 = sand.u32 %s47, 1
          %s182 = scalar_lea.sflag [#allocation4], %s181
          %s183 = sand.u32 %s47, 1
          %s184 = smul.addr %s183, 32
          %s185 = scalar_lea.vmem [#allocation3], %s184
          %s186 = smul.u32 4, %s25
          %188 = vsyncadd %s182, 0
          %s189 = smul.addr %s23, 8
          %s190 = sadd.s32 %s186, %s189
          %s191 = smul.addr %s190, 8
          %s192 = scalar_lea.hbm %s0, %s191
          %s194 = sshll.u32 %s192, 4
          %s195 = int_to_ptr.hbm [resolvable:$true] %s194
          %s196 = sshll.u32 %s185, 4
          %s197 = int_to_ptr.vmem [resolvable:$true] %s196
          %199 = dma.hbm_to_vmem [thread:$0]  %s195, 512, %s197, %s182
        $region24: #{tpu_custom_call.1} parent=19 // pred_fallthru
          _
        // Predicated region
        $region25: #{tpu_custom_call.1} parent=19 // pred_check
          %p200 = pneg %p85
        $region26: #{tpu_custom_call.1} parent=19 // pred_check_branch
          %202 = sbr.rel (%p200) target = $region28
        $region27: #{tpu_custom_call.1} parent=19 // pred_region
          %s203 = sand.u32 %s16, 1
          %s204 = scalar_lea.sflag [#allocation7], %s203
          %s205 = sand.u32 %s75, 1
          %s206 = smul.addr %s205, 1024
          %s207 = scalar_lea.vmem [#allocation6], %s206
          %s208 = smul.u32 32, %s24
          %s209 = smul.u32 4, %s25
          %211 = vsyncadd %s204, 0
          %s212 = smul.addr %s208, 8
          %s213 = sadd.s32 %s209, %s212
          %s214 = smul.addr %s213, 8
          %s215 = scalar_lea.hbm %s1, %s214
          %s216 = sshll.u32 %s215, 4
          %s217 = int_to_ptr.hbm [resolvable:$true] %s216
          %s218 = sshll.u32 %s207, 4
          %s219 = int_to_ptr.vmem [resolvable:$true] %s218
          %224 = dma.hbm_to_vmem [thread:$0]  %s217, 16384, %s219, %s204, 1024, 512, 32
        $region28: #{tpu_custom_call.1} parent=19 // pred_fallthru
          _
      $region20: #{tpu_custom_call.1} parent=5 // pred_fallthru
        _
      %p225 = scmp.le.s32.totalorder 1, %s16
      %p226 = scmp.lt.s32.totalorder %s16, 3
      %p227 = pnand %p225, %p226
      %p228 = pneg %p227
      // Predicated region
      $region29: #{tpu_custom_call.1} parent=5 // pred_check
        _
      $region30: #{tpu_custom_call.1} parent=5 // pred_check_branch
        %230 = sbr.rel (%p227) target = $region32
      $region31: #{tpu_custom_call.1} parent=5 // pred_region
        %s231 = ssub.s32 %s16, 1
        %s232 = sand.u32 %s50, 1
        %s233 = scalar_lea.sflag [#allocation4], %s232
        %s234 = sand.u32 %s50, 1
        %s235 = smul.addr %s234, 32
        %s236 = scalar_lea.vmem [#allocation3], %s235
        // Predicated region
        $region33: #{tpu_custom_call.1} parent=31 // pred_check
          %p237 = pneg %p63
        $region34: #{tpu_custom_call.1} parent=31 // pred_check_branch
          %239 = sbr.rel (%p237) target = $region36
        $region35: #{tpu_custom_call.1} parent=31 // pred_region
          %241 = dma.done %s233, 512
        $region36: #{tpu_custom_call.1} parent=31 // pred_fallthru
          _
        %s242 = sand.u32 %s21, 1
        %s243 = scalar_lea.sflag [#allocation7], %s242
        %s244 = sand.u32 %s78, 1
        %s245 = smul.addr %s244, 1024
        %s246 = scalar_lea.vmem [#allocation6], %s245
        // Predicated region
        $region37: #{tpu_custom_call.1} parent=31 // pred_check
          %p247 = pneg %p91
        $region38: #{tpu_custom_call.1} parent=31 // pred_check_branch
          %249 = sbr.rel (%p247) target = $region40
        $region39: #{tpu_custom_call.1} parent=31 // pred_region
          %251 = dma.done %s243, 16384
        $region40: #{tpu_custom_call.1} parent=31 // pred_fallthru
          _
        // Predicated region
        $region41: #{tpu_custom_call.1} parent=31 // pred_check
          %p252 = pneg %p117
        $region42: #{tpu_custom_call.1} parent=31 // pred_check_branch
          %254 = sbr.rel (%p252) target = $region44
        $region43: #{tpu_custom_call.1} parent=31 // pred_region
          %256 = dma.done [#allocation7], 32
        $region44: #{tpu_custom_call.1} parent=31 // pred_fallthru
          _
        %s257 = sand.u32 %s50, 1
        %s258 = scalar_lea.sflag [#allocation4], %s257
        %s259 = sand.u32 %s50, 1
        %s260 = smul.addr %s259, 32
        %s261 = scalar_lea.vmem [#allocation3], %s260
        %p262 = pneg %p63
        %p263 = pneg %p60
        %s264 = sand.u32 %s21, 1
        %s265 = scalar_lea.sflag [#allocation7], %s264
        %s266 = sand.u32 %s78, 1
        %s267 = smul.addr %s266, 1024
        %s268 = scalar_lea.vmem [#allocation6], %s267
        %p269 = pneg %p91
        %p270 = pneg %p88
        %p271 = pneg %p117
        %p272 = pneg %p114
        %p273 = pneg %p145
        %p274 = pneg %p142
        %s275 = smul.u32 4, %s28
        %s276 = smul.u32 32, %s27
        %s277 = smul.u32 4, %s28
        %s278 = smul.u32 2, %s27
        %s279 = smul.u32 2, %s27
        %p280 = scmp.eq.s32.totalorder %s28, 0
        // Predicated region
        $region45: #{tpu_custom_call.1} parent=31 // pred_check
          %p281 = pneg %p280
        $region46: #{tpu_custom_call.1} parent=31 // pred_check_branch
          %283 = sbr.rel (%p281) target = $region48
        $region47: #{tpu_custom_call.1} parent=31 // pred_region
          %284 = vst [vmem:[#allocation2] sm:$0xff] 0.0
          %285 = vst [vmem:[#allocation2 + $0x8] sm:$0xff] 0.0
        $region48: #{tpu_custom_call.1} parent=31 // pred_fallthru
          _
        %v286 = vld [vmem:[#allocation2] sm:$0xff]
        %v287 = vld [vmem:[#allocation2 + $0x8] sm:$0xff]
        %v288 = vld [vmem:[%s236] sm:$0xff]
        %v289 = vld [vmem:[%s236 + $0x8] sm:$0xff]
        %v290 = vld [vmem:[%s236 + $0x10] sm:$0xff]
        %v291 = vld [vmem:[%s236 + $0x18] sm:$0xff]
        %v292 = vld [vmem:[%s246] sm:$0xff]
        %v293 = vld [vmem:[%s246 + $0x8] sm:$0xff]
        %v294 = vld [vmem:[%s246 + $0x10] sm:$0xff]
        %v295 = vld [vmem:[%s246 + $0x18] sm:$0xff]
        %v296 = vld [vmem:[%s246 + $0x20] sm:$0xff]
        %v297 = vld [vmem:[%s246 + $0x28] sm:$0xff]
        %v298 = vld [vmem:[%s246 + $0x30] sm:$0xff]
        %v299 = vld [vmem:[%s246 + $0x38] sm:$0xff]
        %v300 = vld [vmem:[%s246 + $0x40] sm:$0xff]
        %v301 = vld [vmem:[%s246 + $0x48] sm:$0xff]
        %v302 = vld [vmem:[%s246 + $0x50] sm:$0xff]
        %v303 = vld [vmem:[%s246 + $0x58] sm:$0xff]
        %v304 = vld [vmem:[%s246 + $0x60] sm:$0xff]
        %v305 = vld [vmem:[%s246 + $0x68] sm:$0xff]
        %v306 = vld [vmem:[%s246 + $0x70] sm:$0xff]
        %v307 = vld [vmem:[%s246 + $0x78] sm:$0xff]
        %v308 = vld [vmem:[%s246 + $0x80] sm:$0xff]
        %v309 = vld [vmem:[%s246 + $0x88] sm:$0xff]
        %v310 = vld [vmem:[%s246 + $0x90] sm:$0xff]
        %v311 = vld [vmem:[%s246 + $0x98] sm:$0xff]
        %v312 = vld [vmem:[%s246 + $0xa0] sm:$0xff]
        %v313 = vld [vmem:[%s246 + $0xa8] sm:$0xff]
        %v314 = vld [vmem:[%s246 + $0xb0] sm:$0xff]
        %v315 = vld [vmem:[%s246 + $0xb8] sm:$0xff]
        %v316 = vld [vmem:[%s246 + $0xc0] sm:$0xff]
        %v317 = vld [vmem:[%s246 + $0xc8] sm:$0xff]
        %v318 = vld [vmem:[%s246 + $0xd0] sm:$0xff]
        %v319 = vld [vmem:[%s246 + $0xd8] sm:$0xff]
        %v320 = vld [vmem:[%s246 + $0xe0] sm:$0xff]
        %v321 = vld [vmem:[%s246 + $0xe8] sm:$0xff]
        %v322 = vld [vmem:[%s246 + $0xf0] sm:$0xff]
        %v323 = vld [vmem:[%s246 + $0xf8] sm:$0xff]
        %v324 = vld [vmem:[%s246 + $0x100] sm:$0xff]
        %v325 = vld [vmem:[%s246 + $0x108] sm:$0xff]
        %v326 = vld [vmem:[%s246 + $0x110] sm:$0xff]
        %v327 = vld [vmem:[%s246 + $0x118] sm:$0xff]
        %v328 = vld [vmem:[%s246 + $0x120] sm:$0xff]
        %v329 = vld [vmem:[%s246 + $0x128] sm:$0xff]
        %v330 = vld [vmem:[%s246 + $0x130] sm:$0xff]
        %v331 = vld [vmem:[%s246 + $0x138] sm:$0xff]
        %v332 = vld [vmem:[%s246 + $0x140] sm:$0xff]
        %v333 = vld [vmem:[%s246 + $0x148] sm:$0xff]
        %v334 = vld [vmem:[%s246 + $0x150] sm:$0xff]
        %v335 = vld [vmem:[%s246 + $0x158] sm:$0xff]
        %v336 = vld [vmem:[%s246 + $0x160] sm:$0xff]
        %v337 = vld [vmem:[%s246 + $0x168] sm:$0xff]
        %v338 = vld [vmem:[%s246 + $0x170] sm:$0xff]
        %v339 = vld [vmem:[%s246 + $0x178] sm:$0xff]
        %v340 = vld [vmem:[%s246 + $0x180] sm:$0xff]
        %v341 = vld [vmem:[%s246 + $0x188] sm:$0xff]
        %v342 = vld [vmem:[%s246 + $0x190] sm:$0xff]
        %v343 = vld [vmem:[%s246 + $0x198] sm:$0xff]
        %v344 = vld [vmem:[%s246 + $0x1a0] sm:$0xff]
        %v345 = vld [vmem:[%s246 + $0x1a8] sm:$0xff]
        %v346 = vld [vmem:[%s246 + $0x1b0] sm:$0xff]
        %v347 = vld [vmem:[%s246 + $0x1b8] sm:$0xff]
        %v348 = vld [vmem:[%s246 + $0x1c0] sm:$0xff]
        %v349 = vld [vmem:[%s246 + $0x1c8] sm:$0xff]
        %v350 = vld [vmem:[%s246 + $0x1d0] sm:$0xff]
        %v351 = vld [vmem:[%s246 + $0x1d8] sm:$0xff]
        %v352 = vld [vmem:[%s246 + $0x1e0] sm:$0xff]
        %v353 = vld [vmem:[%s246 + $0x1e8] sm:$0xff]
        %v354 = vld [vmem:[%s246 + $0x1f0] sm:$0xff]
        %v355 = vld [vmem:[%s246 + $0x1f8] sm:$0xff]
        %v356 = vld [vmem:[%s246 + $0x200] sm:$0xff]
        %v357 = vld [vmem:[%s246 + $0x208] sm:$0xff]
        %v358 = vld [vmem:[%s246 + $0x210] sm:$0xff]
        %v359 = vld [vmem:[%s246 + $0x218] sm:$0xff]
        %v360 = vld [vmem:[%s246 + $0x220] sm:$0xff]
        %v361 = vld [vmem:[%s246 + $0x228] sm:$0xff]
        %v362 = vld [vmem:[%s246 + $0x230] sm:$0xff]
        %v363 = vld [vmem:[%s246 + $0x238] sm:$0xff]
        %v364 = vld [vmem:[%s246 + $0x240] sm:$0xff]
        %v365 = vld [vmem:[%s246 + $0x248] sm:$0xff]
        %v366 = vld [vmem:[%s246 + $0x250] sm:$0xff]
        %v367 = vld [vmem:[%s246 + $0x258] sm:$0xff]
        %v368 = vld [vmem:[%s246 + $0x260] sm:$0xff]
        %v369 = vld [vmem:[%s246 + $0x268] sm:$0xff]
        %v370 = vld [vmem:[%s246 + $0x270] sm:$0xff]
        %v371 = vld [vmem:[%s246 + $0x278] sm:$0xff]
        %v372 = vld [vmem:[%s246 + $0x280] sm:$0xff]
        %v373 = vld [vmem:[%s246 + $0x288] sm:$0xff]
        %v374 = vld [vmem:[%s246 + $0x290] sm:$0xff]
        %v375 = vld [vmem:[%s246 + $0x298] sm:$0xff]
        %v376 = vld [vmem:[%s246 + $0x2a0] sm:$0xff]
        %v377 = vld [vmem:[%s246 + $0x2a8] sm:$0xff]
        %v378 = vld [vmem:[%s246 + $0x2b0] sm:$0xff]
        %v379 = vld [vmem:[%s246 + $0x2b8] sm:$0xff]
        %v380 = vld [vmem:[%s246 + $0x2c0] sm:$0xff]
        %v381 = vld [vmem:[%s246 + $0x2c8] sm:$0xff]
        %v382 = vld [vmem:[%s246 + $0x2d0] sm:$0xff]
        %v383 = vld [vmem:[%s246 + $0x2d8] sm:$0xff]
        %v384 = vld [vmem:[%s246 + $0x2e0] sm:$0xff]
        %v385 = vld [vmem:[%s246 + $0x2e8] sm:$0xff]
        %v386 = vld [vmem:[%s246 + $0x2f0] sm:$0xff]
        %v387 = vld [vmem:[%s246 + $0x2f8] sm:$0xff]
        %v388 = vld [vmem:[%s246 + $0x300] sm:$0xff]
        %v389 = vld [vmem:[%s246 + $0x308] sm:$0xff]
        %v390 = vld [vmem:[%s246 + $0x310] sm:$0xff]
        %v391 = vld [vmem:[%s246 + $0x318] sm:$0xff]
        %v392 = vld [vmem:[%s246 + $0x320] sm:$0xff]
        %v393 = vld [vmem:[%s246 + $0x328] sm:$0xff]
        %v394 = vld [vmem:[%s246 + $0x330] sm:$0xff]
        %v395 = vld [vmem:[%s246 + $0x338] sm:$0xff]
        %v396 = vld [vmem:[%s246 + $0x340] sm:$0xff]
        %v397 = vld [vmem:[%s246 + $0x348] sm:$0xff]
        %v398 = vld [vmem:[%s246 + $0x350] sm:$0xff]
        %v399 = vld [vmem:[%s246 + $0x358] sm:$0xff]
        %v400 = vld [vmem:[%s246 + $0x360] sm:$0xff]
        %v401 = vld [vmem:[%s246 + $0x368] sm:$0xff]
        %v402 = vld [vmem:[%s246 + $0x370] sm:$0xff]
        %v403 = vld [vmem:[%s246 + $0x378] sm:$0xff]
        %v404 = vld [vmem:[%s246 + $0x380] sm:$0xff]
        %v405 = vld [vmem:[%s246 + $0x388] sm:$0xff]
        %v406 = vld [vmem:[%s246 + $0x390] sm:$0xff]
        %v407 = vld [vmem:[%s246 + $0x398] sm:$0xff]
        %v408 = vld [vmem:[%s246 + $0x3a0] sm:$0xff]
        %v409 = vld [vmem:[%s246 + $0x3a8] sm:$0xff]
        %v410 = vld [vmem:[%s246 + $0x3b0] sm:$0xff]
        %v411 = vld [vmem:[%s246 + $0x3b8] sm:$0xff]
        %v412 = vld [vmem:[%s246 + $0x3c0] sm:$0xff]
        %v413 = vld [vmem:[%s246 + $0x3c8] sm:$0xff]
        %v414 = vld [vmem:[%s246 + $0x3d0] sm:$0xff]
        %v415 = vld [vmem:[%s246 + $0x3d8] sm:$0xff]
        %v416 = vld [vmem:[%s246 + $0x3e0] sm:$0xff]
        %v417 = vld [vmem:[%s246 + $0x3e8] sm:$0xff]
        %v418 = vld [vmem:[%s246 + $0x3f0] sm:$0xff]
        %v419 = vld [vmem:[%s246 + $0x3f8] sm:$0xff]
        %420 = vmatpush.xpose.msra.mxu0 %v352
        %421 = vmatpush.xpose.msra.mxu0 %v348
        %422 = vmatpush.xpose.msra.mxu0 %v344
        %423 = vmatpush.xpose.msra.mxu0 %v340
        %424 = vmatpush.xpose.msra.mxu0 %v336
        %425 = vmatpush.xpose.msra.mxu0 %v332
        %426 = vmatpush.xpose.msra.mxu0 %v328
        %427 = vmatpush.xpose.msra.mxu0 %v324
        %428 = vmatpush.xpose.msra.mxu0 %v320
        %429 = vmatpush.xpose.msra.mxu0 %v316
        %430 = vmatpush.xpose.msra.mxu0 %v312
        %431 = vmatpush.xpose.msra.mxu0 %v308
        %432 = vmatpush.xpose.msra.mxu0 %v304
        %433 = vmatpush.xpose.msra.mxu0 %v300
        %434 = vmatpush.xpose.msra.mxu0 %v296
        %435 = vmatpush.xpose.msra.mxu0 %v292
        %436 = vmatmul.f32.gmra.mxu0 %v288
        %v437 = vpop.f32.mrf.mxu0
        %v438 = vadd.f32 0.0, %v437
        %439 = vdwg.mxu0
        %440 = vmatpush.xpose.msra.mxu0 %v353
        %441 = vmatpush.xpose.msra.mxu0 %v349
        %442 = vmatpush.xpose.msra.mxu0 %v345
        %443 = vmatpush.xpose.msra.mxu0 %v341
        %444 = vmatpush.xpose.msra.mxu0 %v337
        %445 = vmatpush.xpose.msra.mxu0 %v333
        %446 = vmatpush.xpose.msra.mxu0 %v329
        %447 = vmatpush.xpose.msra.mxu0 %v325
        %448 = vmatpush.xpose.msra.mxu0 %v321
        %449 = vmatpush.xpose.msra.mxu0 %v317
        %450 = vmatpush.xpose.msra.mxu0 %v313
        %451 = vmatpush.xpose.msra.mxu0 %v309
        %452 = vmatpush.xpose.msra.mxu0 %v305
        %453 = vmatpush.xpose.msra.mxu0 %v301
        %454 = vmatpush.xpose.msra.mxu0 %v297
        %455 = vmatpush.xpose.msra.mxu0 %v293
        %456 = vmatmul.f32.gmra.mxu0 %v289
        %v457 = vpop.f32.mrf.mxu0
        %v458 = vadd.f32 %v438, %v457
        %459 = vdwg.mxu0
        %460 = vmatpush.xpose.msra.mxu0 %v354
        %461 = vmatpush.xpose.msra.mxu0 %v350
        %462 = vmatpush.xpose.msra.mxu0 %v346
        %463 = vmatpush.xpose.msra.mxu0 %v342
        %464 = vmatpush.xpose.msra.mxu0 %v338
        %465 = vmatpush.xpose.msra.mxu0 %v334
        %466 = vmatpush.xpose.msra.mxu0 %v330
        %467 = vmatpush.xpose.msra.mxu0 %v326
        %468 = vmatpush.xpose.msra.mxu0 %v322
        %469 = vmatpush.xpose.msra.mxu0 %v318
        %470 = vmatpush.xpose.msra.mxu0 %v314
        %471 = vmatpush.xpose.msra.mxu0 %v310
        %472 = vmatpush.xpose.msra.mxu0 %v306
        %473 = vmatpush.xpose.msra.mxu0 %v302
        %474 = vmatpush.xpose.msra.mxu0 %v298
        %475 = vmatpush.xpose.msra.mxu0 %v294
        %476 = vmatmul.f32.gmra.mxu0 %v290
        %v477 = vpop.f32.mrf.mxu0
        %v478 = vadd.f32 %v458, %v477
        %479 = vdwg.mxu0
        %480 = vmatpush.xpose.msra.mxu0 %v355
        %481 = vmatpush.xpose.msra.mxu0 %v351
        %482 = vmatpush.xpose.msra.mxu0 %v347
        %483 = vmatpush.xpose.msra.mxu0 %v343
        %484 = vmatpush.xpose.msra.mxu0 %v339
        %485 = vmatpush.xpose.msra.mxu0 %v335
        %486 = vmatpush.xpose.msra.mxu0 %v331
        %487 = vmatpush.xpose.msra.mxu0 %v327
        %488 = vmatpush.xpose.msra.mxu0 %v323
        %489 = vmatpush.xpose.msra.mxu0 %v319
        %490 = vmatpush.xpose.msra.mxu0 %v315
        %491 = vmatpush.xpose.msra.mxu0 %v311
        %492 = vmatpush.xpose.msra.mxu0 %v307
        %493 = vmatpush.xpose.msra.mxu0 %v303
        %494 = vmatpush.xpose.msra.mxu0 %v299
        %495 = vmatpush.xpose.msra.mxu0 %v295
        %496 = vmatmul.f32.gmra.mxu0 %v291
        %v497 = vpop.f32.mrf.mxu0
        %v498 = vadd.f32 %v478, %v497
        %499 = vdwg.mxu0
        %500 = vmatpush.xpose.msra.mxu0 %v416
        %501 = vmatpush.xpose.msra.mxu0 %v412
        %502 = vmatpush.xpose.msra.mxu0 %v408
        %503 = vmatpush.xpose.msra.mxu0 %v404
        %504 = vmatpush.xpose.msra.mxu0 %v400
        %505 = vmatpush.xpose.msra.mxu0 %v396
        %506 = vmatpush.xpose.msra.mxu0 %v392
        %507 = vmatpush.xpose.msra.mxu0 %v388
        %508 = vmatpush.xpose.msra.mxu0 %v384
        %509 = vmatpush.xpose.msra.mxu0 %v380
        %510 = vmatpush.xpose.msra.mxu0 %v376
        %511 = vmatpush.xpose.msra.mxu0 %v372
        %512 = vmatpush.xpose.msra.mxu0 %v368
        %513 = vmatpush.xpose.msra.mxu0 %v364
        %514 = vmatpush.xpose.msra.mxu0 %v360
        %515 = vmatpush.xpose.msra.mxu0 %v356
        %516 = vmatmul.f32.gmra.mxu0 %v288
        %v517 = vpop.f32.mrf.mxu0
        %v518 = vadd.f32 0.0, %v517
        %519 = vdwg.mxu0
        %520 = vmatpush.xpose.msra.mxu0 %v417
        %521 = vmatpush.xpose.msra.mxu0 %v413
        %522 = vmatpush.xpose.msra.mxu0 %v409
        %523 = vmatpush.xpose.msra.mxu0 %v405
        %524 = vmatpush.xpose.msra.mxu0 %v401
        %525 = vmatpush.xpose.msra.mxu0 %v397
        %526 = vmatpush.xpose.msra.mxu0 %v393
        %527 = vmatpush.xpose.msra.mxu0 %v389
        %528 = vmatpush.xpose.msra.mxu0 %v385
        %529 = vmatpush.xpose.msra.mxu0 %v381
        %530 = vmatpush.xpose.msra.mxu0 %v377
        %531 = vmatpush.xpose.msra.mxu0 %v373
        %532 = vmatpush.xpose.msra.mxu0 %v369
        %533 = vmatpush.xpose.msra.mxu0 %v365
        %534 = vmatpush.xpose.msra.mxu0 %v361
        %535 = vmatpush.xpose.msra.mxu0 %v357
        %536 = vmatmul.f32.gmra.mxu0 %v289
        %v537 = vpop.f32.mrf.mxu0
        %v538 = vadd.f32 %v518, %v537
        %539 = vdwg.mxu0
        %540 = vmatpush.xpose.msra.mxu0 %v418
        %541 = vmatpush.xpose.msra.mxu0 %v414
        %542 = vmatpush.xpose.msra.mxu0 %v410
        %543 = vmatpush.xpose.msra.mxu0 %v406
        %544 = vmatpush.xpose.msra.mxu0 %v402
        %545 = vmatpush.xpose.msra.mxu0 %v398
        %546 = vmatpush.xpose.msra.mxu0 %v394
        %547 = vmatpush.xpose.msra.mxu0 %v390
        %548 = vmatpush.xpose.msra.mxu0 %v386
        %549 = vmatpush.xpose.msra.mxu0 %v382
        %550 = vmatpush.xpose.msra.mxu0 %v378
        %551 = vmatpush.xpose.msra.mxu0 %v374
        %552 = vmatpush.xpose.msra.mxu0 %v370
        %553 = vmatpush.xpose.msra.mxu0 %v366
        %554 = vmatpush.xpose.msra.mxu0 %v362
        %555 = vmatpush.xpose.msra.mxu0 %v358
        %556 = vmatmul.f32.gmra.mxu0 %v290
        %v557 = vpop.f32.mrf.mxu0
        %v558 = vadd.f32 %v538, %v557
        %559 = vdwg.mxu0
        %560 = vmatpush.xpose.msra.mxu0 %v419
        %561 = vmatpush.xpose.msra.mxu0 %v415
        %562 = vmatpush.xpose.msra.mxu0 %v411
        %563 = vmatpush.xpose.msra.mxu0 %v407
        %564 = vmatpush.xpose.msra.mxu0 %v403
        %565 = vmatpush.xpose.msra.mxu0 %v399
        %566 = vmatpush.xpose.msra.mxu0 %v395
        %567 = vmatpush.xpose.msra.mxu0 %v391
        %568 = vmatpush.xpose.msra.mxu0 %v387
        %569 = vmatpush.xpose.msra.mxu0 %v383
        %570 = vmatpush.xpose.msra.mxu0 %v379
        %571 = vmatpush.xpose.msra.mxu0 %v375
        %572 = vmatpush.xpose.msra.mxu0 %v371
        %573 = vmatpush.xpose.msra.mxu0 %v367
        %574 = vmatpush.xpose.msra.mxu0 %v363
        %575 = vmatpush.xpose.msra.mxu0 %v359
        %576 = vmatmul.f32.gmra.mxu0 %v291
        %v577 = vpop.f32.mrf.mxu0
        %v578 = vadd.f32 %v558, %v577
        %579 = vdwg.mxu0
        %v580 = vadd.f32 %v286, %v498
        %v581 = vadd.f32 %v287, %v578
        %582 = vst [vmem:[#allocation2] sm:$0xff] %v580
        %583 = vst [vmem:[#allocation2 + $0x8] sm:$0xff] %v581
        %p584 = scmp.eq.s32.totalorder %s28, 1
        // Predicated region
        $region49: #{tpu_custom_call.1} parent=31 // pred_check
          %p585 = pneg %p584
        $region50: #{tpu_custom_call.1} parent=31 // pred_check_branch
          %587 = sbr.rel (%p585) target = $region52
        $region51: #{tpu_custom_call.1} parent=31 // pred_region
          %v588 = vld [vmem:[#allocation2] sm:$0xff]
          %v589 = vld [vmem:[#allocation2 + $0x8] sm:$0xff]
          %v590 = vld [vmem:[#allocation8] sm:$0x3]
          %v592 = vperm.slane %v590, 0
          %v593 = vperm.slane %v590, 1
          %v596 = vadd.f32 %v588, %v592
          %v597 = vadd.f32 %v589, %v593
          %v598 = vmax.f32 %v596, 0.0
          %v599 = vmax.f32 %v597, 0.0
          %600 = vst [vmem:[#allocation9] sm:$0xff] %v598
          %601 = vst [vmem:[#allocation9 + $0x8] sm:$0xff] %v599
        $region52: #{tpu_custom_call.1} parent=31 // pred_fallthru
          _
        // Predicated region
        $region53: #{tpu_custom_call.1} parent=31 // pred_check
          %p602 = pneg %p142
        $region54: #{tpu_custom_call.1} parent=31 // pred_check_branch
          %604 = sbr.rel (%p602) target = $region56
        $region55: #{tpu_custom_call.1} parent=31 // pred_region
          %s605 = smul.u32 2, %s27
          %607 = vsyncadd [#allocation5], 0
          %s608 = smul.addr %s26, 2
          %s609 = sadd.s32 %s605, %s608
          %s610 = smul.addr %s609, 8
          %s611 = scalar_lea.hbm %s3, %s610
          %s613 = sshll.u32 [#allocation9], 4
          %s614 = int_to_ptr.vmem [resolvable:$true] %s613
          %s615 = sshll.u32 %s611, 4
          %s616 = int_to_ptr.hbm [resolvable:$true] %s615
          %618 = dma.vmem_to_hbm [thread:$0]  %s614, 256, %s616, [#allocation5]
        $region56: #{tpu_custom_call.1} parent=31 // pred_fallthru
          _
        // Predicated region
        $region57: #{tpu_custom_call.1} parent=31 // pred_check
          %p619 = pneg %p142
        $region58: #{tpu_custom_call.1} parent=31 // pred_check_branch
          %621 = sbr.rel (%p619) target = $region60
        $region59: #{tpu_custom_call.1} parent=31 // pred_region
          %623 = dma.done [#allocation5], 256
        $region60: #{tpu_custom_call.1} parent=31 // pred_fallthru
          _
      $region32: #{tpu_custom_call.1} parent=5 // pred_fallthru
        _
      %p624 = scmp.le.s32.totalorder 2, %s16
      // Predicated region
      $region61: #{tpu_custom_call.1} parent=5 // pred_check
        %p625 = pneg %p624
      $region62: #{tpu_custom_call.1} parent=5 // pred_check_branch
        %627 = sbr.rel (%p625) target = $region64
      $region63: #{tpu_custom_call.1} parent=5 // pred_region
        %s628 = ssub.s32 %s16, 2
      $region64: #{tpu_custom_call.1} parent=5 // pred_fallthru
        _
    $region6: #{tpu_custom_call.1} parent=1 // loop_footer
      %s20 = sadd.s32 1, %s16
    $region7: #{tpu_custom_call.1} parent=1 // loop_footer_branch
      %15 = sbr.rel target = $region3
    $region8: #{tpu_custom_call.1} parent=1 // loop_exit
      _
    %629 = vsyncpa [#allocation4], 1
    %s630 = scalar_lea.sflag [#allocation4], 1
    %631 = vsyncpa %s630, 1
    %632 = vsyncpa [#allocation7], 1
    %s633 = scalar_lea.sflag [#allocation7], 1
    %634 = vsyncpa %s633, 1
    %635 = vsyncpa [#allocation5], 1
    %s636 = scalar_lea.sflag [#allocation5], 1
    %637 = vsyncpa %s636, 1

</llo_original>
